<compile_context>
chip_gen: v5e
topology: v5e:2x2
jax: 0.10.0
libtpu: 0.0.40
codegen_flags: <defaults>
</compile_context>

<pallas_src>
import functools
from collections import defaultdict

import jax
import jax.numpy as jnp
from jax.experimental import pallas as pl
from jax.experimental.pallas import tpu as pltpu


def _round_up(x, m):
    return pl.cdiv(x, m) * m


# ----------------------- gather / normalize / scatter-add kernel -----------------------

def _gather_scatter_kernel(src_ref, tgt_ref, scale_ref, x_ref, out_ref):
    # src_ref/tgt_ref: [TE, 1] int32, scale_ref: [TE, 1] f32
    # x_ref: [Ns_pad, D_pad] f32 (resident), out_ref: [Nt_pad, D_pad] f32 (accumulator)
    @pl.when(pl.program_id(0) == 0)
    def _():
        out_ref[...] = jnp.zeros_like(out_ref)

    src = src_ref[...]
    tgt = tgt_ref[...]
    scale = scale_ref[...]
    x = x_ref[...]

    te = src.shape[0]
    ns = x_ref.shape[0]
    nt = out_ref.shape[0]

    # Gather rows of x via one-hot matmul (MXU): msgs[e, :] = x[src[e], :]
    gather_oh = (jax.lax.broadcasted_iota(jnp.int32, (te, ns), 1) == src).astype(jnp.float32)
    msgs = jnp.dot(gather_oh, x,
                   precision=jax.lax.Precision.HIGHEST,
                   preferred_element_type=jnp.float32)          # [TE, D]
    # Per-edge normalization 1/sqrt(deg_s * deg_t). Padded edges have scale == 0,
    # so they contribute nothing.
    msgs = msgs * scale

    # Scatter-add via one-hot contraction over the edge axis:
    # out[n, d] += sum_e 1[tgt[e] == n] * msgs[e, d]
    scatter_oh = (jax.lax.broadcasted_iota(jnp.int32, (te, nt), 1) == tgt).astype(jnp.float32)
    out_ref[...] += jax.lax.dot_general(
        scatter_oh, msgs,
        dimension_numbers=(((0,), (0,)), ((), ())),
        precision=jax.lax.Precision.HIGHEST,
        preferred_element_type=jnp.float32)


def gcn_message_pass(x_src, src_idx, tgt_idx, inv_norm, num_tgt, *, tile_e=128):
    """scatter_add(x_src[src_idx] * inv_norm[:, None], tgt_idx, num_tgt) via Pallas."""
    n_src, d = x_src.shape
    e = src_idx.shape[0]

    d_pad = _round_up(d, 128)            # lane-dense feature axis (unmasked vld/vst)
    ns_pad = _round_up(n_src, 8)         # sublane alignment
    nt_pad = _round_up(num_tgt, 8)
    e_pad = _round_up(e, tile_e)

    x_p = jnp.pad(x_src.astype(jnp.float32), ((0, ns_pad - n_src), (0, d_pad - d)))
    src_p = jnp.pad(src_idx.astype(jnp.int32).reshape(-1, 1), ((0, e_pad - e), (0, 0)))
    tgt_p = jnp.pad(tgt_idx.astype(jnp.int32).reshape(-1, 1), ((0, e_pad - e), (0, 0)))
    scale_p = jnp.pad(inv_norm.astype(jnp.float32).reshape(-1, 1), ((0, e_pad - e), (0, 0)))

    out = pl.pallas_call(
        _gather_scatter_kernel,
        out_shape=jax.ShapeDtypeStruct((nt_pad, d_pad), jnp.float32),
        grid=(e_pad // tile_e,),
        in_specs=[
            pl.BlockSpec((tile_e, 1), lambda i: (i, 0)),       # src indices (edge-tiled)
            pl.BlockSpec((tile_e, 1), lambda i: (i, 0)),       # tgt indices (edge-tiled)
            pl.BlockSpec((tile_e, 1), lambda i: (i, 0)),       # per-edge 1/sqrt(ds*dt)
            pl.BlockSpec((ns_pad, d_pad), lambda i: (0, 0)),   # source features, resident
        ],
        out_specs=pl.BlockSpec((nt_pad, d_pad), lambda i: (0, 0)),  # VMEM accumulator
        compiler_params=pltpu.CompilerParams(
            dimension_semantics=("arbitrary",)),               # reduction over edge tiles
    )(src_p, tgt_p, scale_p, x_p)

    return out[:num_tgt, :d]


# ------------------------------- finalize (x/div).relu() -------------------------------

def _finalize_kernel(x_ref, o_ref, *, inv_div):
    o_ref[...] = jnp.maximum(x_ref[...] * inv_div, 0.0)


def pallas_finalize(x, inv_div):
    return pl.pallas_call(
        functools.partial(_finalize_kernel, inv_div=float(inv_div)),
        out_shape=jax.ShapeDtypeStruct(x.shape, x.dtype),
    )(x)


# ------------------------- module init (precompute, like __init__) ---------------------

def init_hetero_gcn_light_conv(x_dict, edge_index_dict):
    """Precompute per-edge 1/sqrt(deg_s*deg_t) and the per-target-type divisor."""
    div = defaultdict(int)
    for k in edge_index_dict.keys():
        div[k[-1]] += 1

    inv_norm = {}
    for k, ei in edge_index_dict.items():
        src, tgt = ei[0], ei[1]
        n_src = x_dict[k[0]].shape[0]
        n_tgt = x_dict[k[-1]].shape[0]
        deg_s = jnp.zeros((n_src,), jnp.float32).at[src].add(1.0)
        deg_t = jnp.zeros((n_tgt,), jnp.float32).at[tgt].add(1.0)
        deg_s = jnp.where(deg_s == 0, 1e-6, deg_s)
        deg_t = jnp.where(deg_t == 0, 1e-6, deg_t)
        div_all = jnp.sqrt(deg_s[src] * deg_t[tgt])   # [E]
        inv_norm[k] = 1.0 / div_all
    return {"div": dict(div), "inv_norm": inv_norm}


# -------------------------------------- forward -----------------------------------------

def hetero_gcn_light_conv_forward(precomp, x_dict, edge_index_dict, config):
    acc = {}
    for k, ei in edge_index_dict.items():
        s, t = k[0], k[-1]
        # F.dropout with training=False is the identity; drop_edge/drop_attr are
        # disabled via config (training-time stochastic augmentations).
        msg = gcn_message_pass(
            x_dict[s], ei[0], ei[1], precomp["inv_norm"][k],
            num_tgt=x_dict[t].shape[0])
        acc[t] = msg if t not in acc else acc[t] + msg

    out = {}
    for t, v in acc.items():
        out[t] = pallas_finalize(v, 1.0 / precomp["div"][t])   # (v / div).relu()
    if config["model"]["ReLU"]:
        out = {t: jnp.maximum(v, 0.0) for t, v in out.items()}  # idempotent second relu
    return out


# ------------------------------------ reference ------------------------------------------

def reference_forward(precomp, x_dict, edge_index_dict, config):
    acc = {}
    for k, ei in edge_index_dict.items():
        s, t = k[0], k[-1]
        msg = x_dict[s][ei[0]] * precomp["inv_norm"][k][:, None]
        scat = jnp.zeros_like(x_dict[t]).at[ei[1]].add(msg)
        acc[t] = scat if t not in acc else acc[t] + scat
    out = {t: jnp.maximum(v / precomp["div"][t], 0.0) for t, v in acc.items()}
    if config["model"]["ReLU"]:
        out = {t: jnp.maximum(v, 0.0) for t, v in out.items()}
    return out


# --------------------------------------- main --------------------------------------------

if __name__ == "__main__":
    key = jax.random.PRNGKey(0)
    k1, k2, k3, k4, k5, k6, kx1, kx2 = jax.random.split(key, 8)

    n_user, n_spot, d = 12, 10, 32
    x_dict = {
        "user": jax.random.normal(kx1, (n_user, d), dtype=jnp.float32),
        "spot": jax.random.normal(kx2, (n_spot, d), dtype=jnp.float32),
    }
    edge_index_dict = {
        ("user", "visits", "spot"): jnp.stack(
            [jax.random.randint(k1, (40,), 0, n_user),
             jax.random.randint(k2, (40,), 0, n_spot)]),
        ("spot", "rev_visits", "user"): jnp.stack(
            [jax.random.randint(k3, (40,), 0, n_spot),
             jax.random.randint(k4, (40,), 0, n_user)]),
        ("user", "follows", "user"): jnp.stack(
            [jax.random.randint(k5, (24,), 0, n_user),
             jax.random.randint(k6, (24,), 0, n_user)]),
    }
    config = {
        "model": {"ReLU": True, "dropout": 0.5},
        "trainer": {"drop_edge": False, "drop_attr": False},
    }

    precomp = init_hetero_gcn_light_conv(x_dict, edge_index_dict)

    y_dict = hetero_gcn_light_conv_forward(precomp, x_dict, edge_index_dict, config)
    for v in y_dict.values():
        jax.block_until_ready(v)

    ref_dict = reference_forward(precomp, x_dict, edge_index_dict, config)

    ok = True
    for t, y in y_dict.items():
        ok &= y.shape == ref_dict[t].shape
        ok &= bool(jnp.allclose(y, ref_dict[t], atol=1e-4, rtol=1e-4))

    if ok:
        print("KERNEL_OK")
    else:
        print("KERNEL_MISMATCH")
</pallas_src>

<mosaic_0001>
module attributes {stable_mosaic.version = 11 : i64} {
  func.func @_gather_scatter_kernel(%arg0: i32, %arg1: memref<128x1xi32, #tpu.memory_space<vmem>>, %arg2: memref<128x1xi32, #tpu.memory_space<vmem>>, %arg3: memref<128x1xf32, #tpu.memory_space<vmem>>, %arg4: memref<16x128xf32, #tpu.memory_space<vmem>>, %arg5: memref<16x128xf32, #tpu.memory_space<vmem>>) attributes {dimension_semantics = [#tpu.dimension_semantics<arbitrary>], iteration_bounds = array<i64: 1>, scalar_prefetch = 0 : i64, scratch_operands = 0 : i64, tpu.core_type = #tpu.core_type<tc>, window_params = [{transform_indices = @transform_0, window_bounds = array<i64: 128, 1>}, {transform_indices = @transform_1, window_bounds = array<i64: 128, 1>}, {transform_indices = @transform_2, window_bounds = array<i64: 128, 1>}, {pipeline_mode = #tpu.pipeline_mode<synchronous>, transform_indices = @transform_3, window_bounds = array<i64: 16, 128>}, {pipeline_mode = #tpu.pipeline_mode<synchronous>, transform_indices = @transform_4, window_bounds = array<i64: 16, 128>}]} {
    %c0_i32 = arith.constant 0 : i32
    %0 = arith.cmpi eq, %arg0, %c0_i32 : i32
    %1 = arith.extui %0 : i1 to i32
    %c0_i32_0 = arith.constant 0 : i32
    %2 = arith.cmpi ne, %1, %c0_i32_0 : i32
    scf.if %2 {
      %cst_13 = arith.constant 0.000000e+00 : f32
      %24 = vector.broadcast %cst_13 : f32 to vector<16x128xf32>
      %c0_14 = arith.constant 0 : index
      %c0_15 = arith.constant 0 : index
      %25 = vector.load %arg5[%c0_14, %c0_15] : memref<16x128xf32, #tpu.memory_space<vmem>>, vector<16x128xf32>
      tpu.vector_store %arg5[%c0_14, %c0_15], %24 {strides = array<i32>} : memref<16x128xf32, #tpu.memory_space<vmem>>, vector<16x128xf32>,
    } else {
    }
    %c0 = arith.constant 0 : index
    %c0_1 = arith.constant 0 : index
    %3 = vector.load %arg1[%c0, %c0_1] : memref<128x1xi32, #tpu.memory_space<vmem>>, vector<128x1xi32>
    %c0_2 = arith.constant 0 : index
    %c0_3 = arith.constant 0 : index
    %4 = vector.load %arg2[%c0_2, %c0_3] : memref<128x1xi32, #tpu.memory_space<vmem>>, vector<128x1xi32>
    %c0_4 = arith.constant 0 : index
    %c0_5 = arith.constant 0 : index
    %5 = vector.load %arg3[%c0_4, %c0_5] : memref<128x1xf32, #tpu.memory_space<vmem>>, vector<128x1xf32>
    %c0_6 = arith.constant 0 : index
    %c0_7 = arith.constant 0 : index
    %6 = vector.load %arg4[%c0_6, %c0_7] : memref<16x128xf32, #tpu.memory_space<vmem>>, vector<16x128xf32>
    %7 = tpu.iota {dimensions = array<i32: 1>} : vector<128x16xi32>
    %8 = vector.broadcast %3 : vector<128x1xi32> to vector<128x16xi32>
    %9 = arith.cmpi eq, %7, %8 : vector<128x16xi32>
    %10 = arith.extui %9 : vector<128x16xi1> to vector<128x16xi32>
    %11 = arith.sitofp %10 : vector<128x16xi32> to vector<128x16xf32>
    %cst = arith.constant dense<0.000000e+00> : vector<128x128xf32>
    %12 = tpu.matmul %11, %6, %cst {dimension_numbers = #tpu.dot_dimension_numbers<[1], [0], [0], [1], [0, 0, 1, 1], [], []>, precision = #tpu.contract_precision<fp32>} : vector<128x16xf32>, vector<16x128xf32>, vector<128x128xf32> -> vector<128x128xf32>
    %13 = vector.broadcast %5 : vector<128x1xf32> to vector<128x128xf32>
    %14 = arith.mulf %12, %13 : vector<128x128xf32>
    %15 = tpu.iota {dimensions = array<i32: 1>} : vector<128x16xi32>
    %16 = vector.broadcast %4 : vector<128x1xi32> to vector<128x16xi32>
    %17 = arith.cmpi eq, %15, %16 : vector<128x16xi32>
    %18 = arith.extui %17 : vector<128x16xi1> to vector<128x16xi32>
    %19 = arith.sitofp %18 : vector<128x16xi32> to vector<128x16xf32>
    %c0_8 = arith.constant 0 : index
    %c0_9 = arith.constant 0 : index
    %20 = vector.load %arg5[%c0_8, %c0_9] : memref<16x128xf32, #tpu.memory_space<vmem>>, vector<16x128xf32>
    %cst_10 = arith.constant dense<0.000000e+00> : vector<16x128xf32>
    %21 = tpu.matmul %19, %14, %cst_10 {dimension_numbers = #tpu.dot_dimension_numbers<[0], [0], [1], [1], [0, 1, 1, 1], [], []>, precision = #tpu.contract_precision<fp32>} : vector<128x16xf32>, vector<128x128xf32>, vector<16x128xf32> -> vector<16x128xf32>
    %22 = arith.addf %20, %21 : vector<16x128xf32>
    %c0_11 = arith.constant 0 : index
    %c0_12 = arith.constant 0 : index
    %23 = vector.load %arg5[%c0_11, %c0_12] : memref<16x128xf32, #tpu.memory_space<vmem>>, vector<16x128xf32>
    tpu.vector_store %arg5[%c0_11, %c0_12], %22 {strides = array<i32>} : memref<16x128xf32, #tpu.memory_space<vmem>>, vector<16x128xf32>,
    return
  }
  func.func @transform_0(%arg0: i32) -> (i32, i32) {
    %c0_i32 = arith.constant 0 : i32
    %c0_i32_0 = arith.constant 0 : i32
    return %arg0, %c0_i32 : i32, i32
  }
  func.func @transform_1(%arg0: i32) -> (i32, i32) {
    %c0_i32 = arith.constant 0 : i32
    %c0_i32_0 = arith.constant 0 : i32
    return %arg0, %c0_i32 : i32, i32
  }
  func.func @transform_2(%arg0: i32) -> (i32, i32) {
    %c0_i32 = arith.constant 0 : i32
    %c0_i32_0 = arith.constant 0 : i32
    return %arg0, %c0_i32 : i32, i32
  }
  func.func @transform_3(%arg0: i32) -> (i32, i32) {
    %c0_i32 = arith.constant 0 : i32
    %c0_i32_0 = arith.constant 0 : i32
    %c0_i32_1 = arith.constant 0 : i32
    return %c0_i32, %c0_i32_0 : i32, i32
  }
  func.func @transform_4(%arg0: i32) -> (i32, i32) {
    %c0_i32 = arith.constant 0 : i32
    %c0_i32_0 = arith.constant 0 : i32
    %c0_i32_1 = arith.constant 0 : i32
    return %c0_i32, %c0_i32_0 : i32, i32
  }
}

</mosaic_0001>

<llo_original>
// kernel: tpu_custom_call.1
$region0: #{tpu_custom_call.1}
  #allocation0 [shape = 'u32[]', space=smem, size = 0x4, offset = 0x4, fixed_abs, tag = 'smem constant byte address 0x4 - core index']
  #allocation1 [shape = 'u32[72,128]{1,0:T(1,128)}', space=vmem, size = 0x9000, scoped, tag = 'internal scratch']
  %s0 = inlined_call_operand.vmem [shape: s32[128,1], index: 0, kind: input, shape index: {}]
  %s1 = inlined_call_operand.vmem [shape: s32[128,1], index: 1, kind: input, shape index: {}]
  %s2 = inlined_call_operand.vmem [shape: f32[128,1], index: 2, kind: input, shape index: {}]
  %s3 = inlined_call_operand.vmem [shape: f32[16,128], index: 3, kind: input, shape index: {}]
  %s4 = inlined_call_operand.hbm [shape: f32[16,128], index: 4, kind: output, shape index: {}]
  %s5 = sld [smem:[#allocation0]]
  $region30: #{tpu_custom_call.1} parent=0
    _
  %s7 = ssub.s32 1, %s5
  %s8 = scalar_select 0, %s7, %s5
  $region1: #{tpu_custom_call.1} parent=0
    #allocation2 [shape = 'u8[8192]{0}', space=vmem, size = 0x2000, scoped, tag = 'output window, operand 0, single buffered']
    #allocation3 [shape = 's32[1]{0}', space=sflag, size = 0x4, scoped, tag = 'scoped memory for tpu_custom_call.1']
    %9 = vsyncpa [#allocation3], 0
    // Predicated region
    $region2: #{tpu_custom_call.1} parent=1 // pred_check
      _
    $region3: #{tpu_custom_call.1} parent=1 // pred_check_branch
      %11 = sbr.rel (0) target = $region5
    $region4: #{tpu_custom_call.1} parent=1 // pred_region
      _
    $region5: #{tpu_custom_call.1} parent=1 // pred_fallthru
      _
    // Predicated region
    $region6: #{tpu_custom_call.1} parent=1 // pred_check
      _
    $region7: #{tpu_custom_call.1} parent=1 // pred_check_branch
      %13 = sbr.rel (0) target = $region9
    $region8: #{tpu_custom_call.1} parent=1 // pred_region
      _
    $region9: #{tpu_custom_call.1} parent=1 // pred_fallthru
      _
    // Predicated region
    $region10: #{tpu_custom_call.1} parent=1 // pred_check
      _
    $region11: #{tpu_custom_call.1} parent=1 // pred_check_branch
      %15 = sbr.rel (0) target = $region13
    $region12: #{tpu_custom_call.1} parent=1 // pred_region
      _
    $region13: #{tpu_custom_call.1} parent=1 // pred_fallthru
      _
    // Predicated region
    $region14: #{tpu_custom_call.1} parent=1 // pred_check
      _
    $region15: #{tpu_custom_call.1} parent=1 // pred_check_branch
      %17 = sbr.rel (0) target = $region17
    $region16: #{tpu_custom_call.1} parent=1 // pred_region
      _
    $region17: #{tpu_custom_call.1} parent=1 // pred_fallthru
      _
    %p18 = scmp.eq.s32.totalorder 0, 0
    // Predicated region
    $region18: #{tpu_custom_call.1} parent=1 // pred_check
      %p19 = pneg %p18
    $region19: #{tpu_custom_call.1} parent=1 // pred_check_branch
      %21 = sbr.rel (%p19) target = $region21
    $region20: #{tpu_custom_call.1} parent=1 // pred_region
      %22 = vst [vmem:[#allocation2] sm:$0xff] 0.0
      %23 = vst [vmem:[#allocation2 + $0x8] sm:$0xff] 0.0
    $region21: #{tpu_custom_call.1} parent=1 // pred_fallthru
      _
    %v24 = vld [vmem:[%s0] sm:$0xff]
    %v25 = vld [vmem:[%s0 + $0x8] sm:$0xff]
    %v26 = vld [vmem:[%s0 + $0x10] sm:$0xff]
    %v27 = vld [vmem:[%s0 + $0x18] sm:$0xff]
    %v28 = vld [vmem:[%s0 + $0x20] sm:$0xff]
    %v29 = vld [vmem:[%s0 + $0x28] sm:$0xff]
    %v30 = vld [vmem:[%s0 + $0x30] sm:$0xff]
    %v31 = vld [vmem:[%s0 + $0x38] sm:$0xff]
    %v32 = vld [vmem:[%s0 + $0x40] sm:$0xff]
    %v33 = vld [vmem:[%s0 + $0x48] sm:$0xff]
    %v34 = vld [vmem:[%s0 + $0x50] sm:$0xff]
    %v35 = vld [vmem:[%s0 + $0x58] sm:$0xff]
    %v36 = vld [vmem:[%s0 + $0x60] sm:$0xff]
    %v37 = vld [vmem:[%s0 + $0x68] sm:$0xff]
    %v38 = vld [vmem:[%s0 + $0x70] sm:$0xff]
    %v39 = vld [vmem:[%s0 + $0x78] sm:$0xff]
    %v40 = vld [vmem:[%s1] sm:$0xff]
    %v41 = vld [vmem:[%s1 + $0x8] sm:$0xff]
    %v42 = vld [vmem:[%s1 + $0x10] sm:$0xff]
    %v43 = vld [vmem:[%s1 + $0x18] sm:$0xff]
    %v44 = vld [vmem:[%s1 + $0x20] sm:$0xff]
    %v45 = vld [vmem:[%s1 + $0x28] sm:$0xff]
    %v46 = vld [vmem:[%s1 + $0x30] sm:$0xff]
    %v47 = vld [vmem:[%s1 + $0x38] sm:$0xff]
    %v48 = vld [vmem:[%s1 + $0x40] sm:$0xff]
    %v49 = vld [vmem:[%s1 + $0x48] sm:$0xff]
    %v50 = vld [vmem:[%s1 + $0x50] sm:$0xff]
    %v51 = vld [vmem:[%s1 + $0x58] sm:$0xff]
    %v52 = vld [vmem:[%s1 + $0x60] sm:$0xff]
    %v53 = vld [vmem:[%s1 + $0x68] sm:$0xff]
    %v54 = vld [vmem:[%s1 + $0x70] sm:$0xff]
    %v55 = vld [vmem:[%s1 + $0x78] sm:$0xff]
    %v56 = vld [vmem:[%s2] sm:$0xff]
    %v57 = vld [vmem:[%s2 + $0x8] sm:$0xff]
    %v58 = vld [vmem:[%s2 + $0x10] sm:$0xff]
    %v59 = vld [vmem:[%s2 + $0x18] sm:$0xff]
    %v60 = vld [vmem:[%s2 + $0x20] sm:$0xff]
    %v61 = vld [vmem:[%s2 + $0x28] sm:$0xff]
    %v62 = vld [vmem:[%s2 + $0x30] sm:$0xff]
    %v63 = vld [vmem:[%s2 + $0x38] sm:$0xff]
    %v64 = vld [vmem:[%s2 + $0x40] sm:$0xff]
    %v65 = vld [vmem:[%s2 + $0x48] sm:$0xff]
    %v66 = vld [vmem:[%s2 + $0x50] sm:$0xff]
    %v67 = vld [vmem:[%s2 + $0x58] sm:$0xff]
    %v68 = vld [vmem:[%s2 + $0x60] sm:$0xff]
    %v69 = vld [vmem:[%s2 + $0x68] sm:$0xff]
    %v70 = vld [vmem:[%s2 + $0x70] sm:$0xff]
    %v71 = vld [vmem:[%s2 + $0x78] sm:$0xff]
    %v72 = vld [vmem:[%s3] sm:$0xff]
    %v73 = vld [vmem:[%s3 + $0x8] sm:$0xff]
    %v74 = vlaneseq
    %v75 = vand.u32 %v74, 127
    %76 = vset.pattern.permute.xlu0 0
    %77 = vperm.xlu0 %76, %v24
    %v78 = vpop.permute.xlu0 %77
    %79 = vset.pattern.permute.xlu0 0
    %80 = vperm.xlu0 %79, %v25
    %v81 = vpop.permute.xlu0 %80
    %82 = vset.pattern.permute.xlu0 0
    %83 = vperm.xlu0 %82, %v26
    %v84 = vpop.permute.xlu0 %83
    %85 = vset.pattern.permute.xlu0 0
    %86 = vperm.xlu0 %85, %v27
    %v87 = vpop.permute.xlu0 %86
    %88 = vset.pattern.permute.xlu0 0
    %89 = vperm.xlu0 %88, %v28
    %v90 = vpop.permute.xlu0 %89
    %91 = vset.pattern.permute.xlu0 0
    %92 = vperm.xlu0 %91, %v29
    %v93 = vpop.permute.xlu0 %92
    %94 = vset.pattern.permute.xlu0 0
    %95 = vperm.xlu0 %94, %v30
    %v96 = vpop.permute.xlu0 %95
    %97 = vset.pattern.permute.xlu0 0
    %98 = vperm.xlu0 %97, %v31
    %v99 = vpop.permute.xlu0 %98
    %100 = vset.pattern.permute.xlu0 0
    %101 = vperm.xlu0 %100, %v32
    %v102 = vpop.permute.xlu0 %101
    %103 = vset.pattern.permute.xlu0 0
    %104 = vperm.xlu0 %103, %v33
    %v105 = vpop.permute.xlu0 %104
    %106 = vset.pattern.permute.xlu0 0
    %107 = vperm.xlu0 %106, %v34
    %v108 = vpop.permute.xlu0 %107
    %109 = vset.pattern.permute.xlu0 0
    %110 = vperm.xlu0 %109, %v35
    %v111 = vpop.permute.xlu0 %110
    %112 = vset.pattern.permute.xlu0 0
    %113 = vperm.xlu0 %112, %v36
    %v114 = vpop.permute.xlu0 %113
    %115 = vset.pattern.permute.xlu0 0
    %116 = vperm.xlu0 %115, %v37
    %v117 = vpop.permute.xlu0 %116
    %118 = vset.pattern.permute.xlu0 0
    %119 = vperm.xlu0 %118, %v38
    %v120 = vpop.permute.xlu0 %119
    %121 = vset.pattern.permute.xlu0 0
    %122 = vperm.xlu0 %121, %v39
    %v123 = vpop.permute.xlu0 %122
    %vm124 = vcmp.eq.s32.totalorder %v75, %v78
    %vm125 = vcmp.eq.s32.totalorder %v75, %v81
    %vm126 = vcmp.eq.s32.totalorder %v75, %v84
    %vm127 = vcmp.eq.s32.totalorder %v75, %v87
    %vm128 = vcmp.eq.s32.totalorder %v75, %v90
    %vm129 = vcmp.eq.s32.totalorder %v75, %v93
    %vm130 = vcmp.eq.s32.totalorder %v75, %v96
    %vm131 = vcmp.eq.s32.totalorder %v75, %v99
    %vm132 = vcmp.eq.s32.totalorder %v75, %v102
    %vm133 = vcmp.eq.s32.totalorder %v75, %v105
    %vm134 = vcmp.eq.s32.totalorder %v75, %v108
    %vm135 = vcmp.eq.s32.totalorder %v75, %v111
    %vm136 = vcmp.eq.s32.totalorder %v75, %v114
    %vm137 = vcmp.eq.s32.totalorder %v75, %v117
    %vm138 = vcmp.eq.s32.totalorder %v75, %v120
    %vm139 = vcmp.eq.s32.totalorder %v75, %v123
    %v140 = vsel %vm124, 1, 0
    %v141 = vsel %vm125, 1, 0
    %v142 = vsel %vm126, 1, 0
    %v143 = vsel %vm127, 1, 0
    %v144 = vsel %vm128, 1, 0
    %v145 = vsel %vm129, 1, 0
    %v146 = vsel %vm130, 1, 0
    %v147 = vsel %vm131, 1, 0
    %v148 = vsel %vm132, 1, 0
    %v149 = vsel %vm133, 1, 0
    %v150 = vsel %vm134, 1, 0
    %v151 = vsel %vm135, 1, 0
    %v152 = vsel %vm136, 1, 0
    %v153 = vsel %vm137, 1, 0
    %v154 = vsel %vm138, 1, 0
    %v155 = vsel %vm139, 1, 0
    %v156 = vcvt.s32.f32 %v140
    %v157 = vcvt.s32.f32 %v141
    %v158 = vcvt.s32.f32 %v142
    %v159 = vcvt.s32.f32 %v143
    %v160 = vcvt.s32.f32 %v144
    %v161 = vcvt.s32.f32 %v145
    %v162 = vcvt.s32.f32 %v146
    %v163 = vcvt.s32.f32 %v147
    %v164 = vcvt.s32.f32 %v148
    %v165 = vcvt.s32.f32 %v149
    %v166 = vcvt.s32.f32 %v150
    %v167 = vcvt.s32.f32 %v151
    %v168 = vcvt.s32.f32 %v152
    %v169 = vcvt.s32.f32 %v153
    %v170 = vcvt.s32.f32 %v154
    %v171 = vcvt.s32.f32 %v155
    %vm172 = vcmask 130048
    %v174 = vsel %vm172, %v156, 0
    %v177 = vsel %vm172, %v157, 0
    %v180 = vsel %vm172, %v158, 0
    %v183 = vsel %vm172, %v159, 0
    %v186 = vsel %vm172, %v160, 0
    %v189 = vsel %vm172, %v161, 0
    %v192 = vsel %vm172, %v162, 0
    %v195 = vsel %vm172, %v163, 0
    %v198 = vsel %vm172, %v164, 0
    %v201 = vsel %vm172, %v165, 0
    %v204 = vsel %vm172, %v166, 0
    %v207 = vsel %vm172, %v167, 0
    %v210 = vsel %vm172, %v168, 0
    %v213 = vsel %vm172, %v169, 0
    %v216 = vsel %vm172, %v170, 0
    %v219 = vsel %vm172, %v171, 0
    %221 = vmatpush.msra.mxu0 0.0
    %222 = vmatpush.msra.mxu0 0.0
    %223 = vmatpush.msra.mxu0 0.0
    %224 = vmatpush.msra.mxu0 0.0
    %225 = vmatpush.msra.mxu0 0.0
    %226 = vmatpush.msra.mxu0 0.0
    %227 = vmatpush.msra.mxu0 0.0
    %228 = vmatpush.msra.mxu0 0.0
    %229 = vmatpush.msra.mxu0 0.0
    %230 = vmatpush.msra.mxu0 0.0
    %231 = vmatpush.msra.mxu0 0.0
    %232 = vmatpush.msra.mxu0 0.0
    %233 = vmatpush.msra.mxu0 0.0
    %234 = vmatpush.msra.mxu0 0.0
    %v235 = vand.u32 %v73, 4294901760
    %236 = vmatpush.msra.mxu0 %v235
    %v237 = vand.u32 %v72, 4294901760
    %238 = vmatpush.msra.mxu0 %v237
    %v239 = vand.u32 %v174, 4294901760
    %v240 = vsub.f32 %v174, %v239
    %v241 = vand.u32 %v240, 4294901760
    %v242 = vsub.f32 %v240, %v241
    %v243 = vand.u32 %v242, 4294901760
    %244 = vmatmul.f32.gmra.mxu0 %v243
    %v245 = vpop.f32.mrf.mxu0
    %v246 = vadd.f32 0.0, %v245
    %v247 = vand.u32 %v177, 4294901760
    %v248 = vsub.f32 %v177, %v247
    %v249 = vand.u32 %v248, 4294901760
    %v250 = vsub.f32 %v248, %v249
    %v251 = vand.u32 %v250, 4294901760
    %252 = vmatmul.f32.gmra.mxu0 %v251
    %v253 = vpop.f32.mrf.mxu0
    %v254 = vadd.f32 0.0, %v253
    %v255 = vand.u32 %v180, 4294901760
    %v256 = vsub.f32 %v180, %v255
    %v257 = vand.u32 %v256, 4294901760
    %v258 = vsub.f32 %v256, %v257
    %v259 = vand.u32 %v258, 4294901760
    %260 = vmatmul.f32.gmra.mxu0 %v259
    %v261 = vpop.f32.mrf.mxu0
    %v262 = vadd.f32 0.0, %v261
    %v263 = vand.u32 %v183, 4294901760
    %v264 = vsub.f32 %v183, %v263
    %v265 = vand.u32 %v264, 4294901760
    %v266 = vsub.f32 %v264, %v265
    %v267 = vand.u32 %v266, 4294901760
    %268 = vmatmul.f32.gmra.mxu0 %v267
    %v269 = vpop.f32.mrf.mxu0
    %v270 = vadd.f32 0.0, %v269
    %v271 = vand.u32 %v186, 4294901760
    %v272 = vsub.f32 %v186, %v271
    %v273 = vand.u32 %v272, 4294901760
    %v274 = vsub.f32 %v272, %v273
    %v275 = vand.u32 %v274, 4294901760
    %276 = vmatmul.f32.gmra.mxu0 %v275
    %v277 = vpop.f32.mrf.mxu0
    %v278 = vadd.f32 0.0, %v277
    %v279 = vand.u32 %v189, 4294901760
    %v280 = vsub.f32 %v189, %v279
    %v281 = vand.u32 %v280, 4294901760
    %v282 = vsub.f32 %v280, %v281
    %v283 = vand.u32 %v282, 4294901760
    %284 = vmatmul.f32.gmra.mxu0 %v283
    %v285 = vpop.f32.mrf.mxu0
    %v286 = vadd.f32 0.0, %v285
    %v287 = vand.u32 %v192, 4294901760
    %v288 = vsub.f32 %v192, %v287
    %v289 = vand.u32 %v288, 4294901760
    %v290 = vsub.f32 %v288, %v289
    %v291 = vand.u32 %v290, 4294901760
    %292 = vmatmul.f32.gmra.mxu0 %v291
    %v293 = vpop.f32.mrf.mxu0
    %v294 = vadd.f32 0.0, %v293
    %v295 = vand.u32 %v195, 4294901760
    %v296 = vsub.f32 %v195, %v295
    %v297 = vand.u32 %v296, 4294901760
    %v298 = vsub.f32 %v296, %v297
    %v299 = vand.u32 %v298, 4294901760
    %300 = vmatmul.f32.gmra.mxu0 %v299
    %v301 = vpop.f32.mrf.mxu0
    %v302 = vadd.f32 0.0, %v301
    %v303 = vand.u32 %v198, 4294901760
    %v304 = vsub.f32 %v198, %v303
    %v305 = vand.u32 %v304, 4294901760
    %v306 = vsub.f32 %v304, %v305
    %v307 = vand.u32 %v306, 4294901760
    %308 = vmatmul.f32.gmra.mxu0 %v307
    %v309 = vpop.f32.mrf.mxu0
    %v310 = vadd.f32 0.0, %v309
    %v311 = vand.u32 %v201, 4294901760
    %v312 = vsub.f32 %v201, %v311
    %v313 = vand.u32 %v312, 4294901760
    %v314 = vsub.f32 %v312, %v313
    %v315 = vand.u32 %v314, 4294901760
    %316 = vmatmul.f32.gmra.mxu0 %v315
    %v317 = vpop.f32.mrf.mxu0
    %v318 = vadd.f32 0.0, %v317
    %v319 = vand.u32 %v204, 4294901760
    %v320 = vsub.f32 %v204, %v319
    %v321 = vand.u32 %v320, 4294901760
    %v322 = vsub.f32 %v320, %v321
    %v323 = vand.u32 %v322, 4294901760
    %324 = vmatmul.f32.gmra.mxu0 %v323
    %v325 = vpop.f32.mrf.mxu0
    %v326 = vadd.f32 0.0, %v325
    %v327 = vand.u32 %v207, 4294901760
    %v328 = vsub.f32 %v207, %v327
    %v329 = vand.u32 %v328, 4294901760
    %v330 = vsub.f32 %v328, %v329
    %v331 = vand.u32 %v330, 4294901760
    %332 = vmatmul.f32.gmra.mxu0 %v331
    %v333 = vpop.f32.mrf.mxu0
    %v334 = vadd.f32 0.0, %v333
    %v335 = vand.u32 %v210, 4294901760
    %v336 = vsub.f32 %v210, %v335
    %v337 = vand.u32 %v336, 4294901760
    %v338 = vsub.f32 %v336, %v337
    %v339 = vand.u32 %v338, 4294901760
    %340 = vmatmul.f32.gmra.mxu0 %v339
    %v341 = vpop.f32.mrf.mxu0
    %v342 = vadd.f32 0.0, %v341
    %v343 = vand.u32 %v213, 4294901760
    %v344 = vsub.f32 %v213, %v343
    %v345 = vand.u32 %v344, 4294901760
    %v346 = vsub.f32 %v344, %v345
    %v347 = vand.u32 %v346, 4294901760
    %348 = vmatmul.f32.gmra.mxu0 %v347
    %v349 = vpop.f32.mrf.mxu0
    %v350 = vadd.f32 0.0, %v349
    %v351 = vand.u32 %v216, 4294901760
    %v352 = vsub.f32 %v216, %v351
    %v353 = vand.u32 %v352, 4294901760
    %v354 = vsub.f32 %v352, %v353
    %v355 = vand.u32 %v354, 4294901760
    %356 = vmatmul.f32.gmra.mxu0 %v355
    %v357 = vpop.f32.mrf.mxu0
    %v358 = vadd.f32 0.0, %v357
    %v359 = vand.u32 %v219, 4294901760
    %v360 = vsub.f32 %v219, %v359
    %v361 = vand.u32 %v360, 4294901760
    %v362 = vsub.f32 %v360, %v361
    %v363 = vand.u32 %v362, 4294901760
    %364 = vmatmul.f32.gmra.mxu0 %v363
    %v365 = vpop.f32.mrf.mxu0
    %v366 = vadd.f32 0.0, %v365
    %367 = vdwg.mxu0
    %368 = vmatpush.msra.mxu0 0.0
    %369 = vmatpush.msra.mxu0 0.0
    %370 = vmatpush.msra.mxu0 0.0
    %371 = vmatpush.msra.mxu0 0.0
    %372 = vmatpush.msra.mxu0 0.0
    %373 = vmatpush.msra.mxu0 0.0
    %374 = vmatpush.msra.mxu0 0.0
    %375 = vmatpush.msra.mxu0 0.0
    %376 = vmatpush.msra.mxu0 0.0
    %377 = vmatpush.msra.mxu0 0.0
    %378 = vmatpush.msra.mxu0 0.0
    %379 = vmatpush.msra.mxu0 0.0
    %380 = vmatpush.msra.mxu0 0.0
    %381 = vmatpush.msra.mxu0 0.0
    %v382 = vand.u32 %v73, 4294901760
    %v383 = vsub.f32 %v73, %v382
    %v384 = vand.u32 %v383, 4294901760
    %v385 = vsub.f32 %v383, %v384
    %v386 = vand.u32 %v385, 4294901760
    %387 = vmatpush.msra.mxu0 %v386
    %v388 = vand.u32 %v72, 4294901760
    %v389 = vsub.f32 %v72, %v388
    %v390 = vand.u32 %v389, 4294901760
    %v391 = vsub.f32 %v389, %v390
    %v392 = vand.u32 %v391, 4294901760
    %393 = vmatpush.msra.mxu0 %v392
    %v394 = vand.u32 %v174, 4294901760
    %395 = vmatmul.f32.gmra.mxu0 %v394
    %v396 = vpop.f32.mrf.mxu0
    %v397 = vadd.f32 %v246, %v396
    %v398 = vand.u32 %v177, 4294901760
    %399 = vmatmul.f32.gmra.mxu0 %v398
    %v400 = vpop.f32.mrf.mxu0
    %v401 = vadd.f32 %v254, %v400
    %v402 = vand.u32 %v180, 4294901760
    %403 = vmatmul.f32.gmra.mxu0 %v402
    %v404 = vpop.f32.mrf.mxu0
    %v405 = vadd.f32 %v262, %v404
    %v406 = vand.u32 %v183, 4294901760
    %407 = vmatmul.f32.gmra.mxu0 %v406
    %v408 = vpop.f32.mrf.mxu0
    %v409 = vadd.f32 %v270, %v408
    %v410 = vand.u32 %v186, 4294901760
    %411 = vmatmul.f32.gmra.mxu0 %v410
    %v412 = vpop.f32.mrf.mxu0
    %v413 = vadd.f32 %v278, %v412
    %v414 = vand.u32 %v189, 4294901760
    %415 = vmatmul.f32.gmra.mxu0 %v414
    %v416 = vpop.f32.mrf.mxu0
    %v417 = vadd.f32 %v286, %v416
    %v418 = vand.u32 %v192, 4294901760
    %419 = vmatmul.f32.gmra.mxu0 %v418
    %v420 = vpop.f32.mrf.mxu0
    %v421 = vadd.f32 %v294, %v420
    %v422 = vand.u32 %v195, 4294901760
    %423 = vmatmul.f32.gmra.mxu0 %v422
    %v424 = vpop.f32.mrf.mxu0
    %v425 = vadd.f32 %v302, %v424
    %v426 = vand.u32 %v198, 4294901760
    %427 = vmatmul.f32.gmra.mxu0 %v426
    %v428 = vpop.f32.mrf.mxu0
    %v429 = vadd.f32 %v310, %v428
    %v430 = vand.u32 %v201, 4294901760
    %431 = vmatmul.f32.gmra.mxu0 %v430
    %v432 = vpop.f32.mrf.mxu0
    %v433 = vadd.f32 %v318, %v432
    %v434 = vand.u32 %v204, 4294901760
    %435 = vmatmul.f32.gmra.mxu0 %v434
    %v436 = vpop.f32.mrf.mxu0
    %v437 = vadd.f32 %v326, %v436
    %v438 = vand.u32 %v207, 4294901760
    %439 = vmatmul.f32.gmra.mxu0 %v438
    %v440 = vpop.f32.mrf.mxu0
    %v441 = vadd.f32 %v334, %v440
    %v442 = vand.u32 %v210, 4294901760
    %443 = vmatmul.f32.gmra.mxu0 %v442
    %v444 = vpop.f32.mrf.mxu0
    %v445 = vadd.f32 %v342, %v444
    %v446 = vand.u32 %v213, 4294901760
    %447 = vmatmul.f32.gmra.mxu0 %v446
    %v448 = vpop.f32.mrf.mxu0
    %v449 = vadd.f32 %v350, %v448
    %v450 = vand.u32 %v216, 4294901760
    %451 = vmatmul.f32.gmra.mxu0 %v450
    %v452 = vpop.f32.mrf.mxu0
    %v453 = vadd.f32 %v358, %v452
    %v454 = vand.u32 %v219, 4294901760
    %455 = vmatmul.f32.gmra.mxu0 %v454
    %v456 = vpop.f32.mrf.mxu0
    %v457 = vadd.f32 %v366, %v456
    %458 = vdwg.mxu0
    %459 = vmatpush.msra.mxu0 0.0
    %460 = vmatpush.msra.mxu0 0.0
    %461 = vmatpush.msra.mxu0 0.0
    %462 = vmatpush.msra.mxu0 0.0
    %463 = vmatpush.msra.mxu0 0.0
    %464 = vmatpush.msra.mxu0 0.0
    %465 = vmatpush.msra.mxu0 0.0
    %466 = vmatpush.msra.mxu0 0.0
    %467 = vmatpush.msra.mxu0 0.0
    %468 = vmatpush.msra.mxu0 0.0
    %469 = vmatpush.msra.mxu0 0.0
    %470 = vmatpush.msra.mxu0 0.0
    %471 = vmatpush.msra.mxu0 0.0
    %472 = vmatpush.msra.mxu0 0.0
    %v473 = vand.u32 %v73, 4294901760
    %v474 = vsub.f32 %v73, %v473
    %475 = vmatpush.msra.mxu0 %v474
    %v476 = vand.u32 %v72, 4294901760
    %v477 = vsub.f32 %v72, %v476
    %478 = vmatpush.msra.mxu0 %v477
    %v479 = vand.u32 %v174, 4294901760
    %v480 = vsub.f32 %v174, %v479
    %481 = vmatmul.f32.gmra.mxu0 %v480
    %v482 = vpop.f32.mrf.mxu0
    %v483 = vadd.f32 %v397, %v482
    %v484 = vand.u32 %v177, 4294901760
    %v485 = vsub.f32 %v177, %v484
    %486 = vmatmul.f32.gmra.mxu0 %v485
    %v487 = vpop.f32.mrf.mxu0
    %v488 = vadd.f32 %v401, %v487
    %v489 = vand.u32 %v180, 4294901760
    %v490 = vsub.f32 %v180, %v489
    %491 = vmatmul.f32.gmra.mxu0 %v490
    %v492 = vpop.f32.mrf.mxu0
    %v493 = vadd.f32 %v405, %v492
    %v494 = vand.u32 %v183, 4294901760
    %v495 = vsub.f32 %v183, %v494
    %496 = vmatmul.f32.gmra.mxu0 %v495
    %v497 = vpop.f32.mrf.mxu0
    %v498 = vadd.f32 %v409, %v497
    %v499 = vand.u32 %v186, 4294901760
    %v500 = vsub.f32 %v186, %v499
    %501 = vmatmul.f32.gmra.mxu0 %v500
    %v502 = vpop.f32.mrf.mxu0
    %v503 = vadd.f32 %v413, %v502
    %v504 = vand.u32 %v189, 4294901760
    %v505 = vsub.f32 %v189, %v504
    %506 = vmatmul.f32.gmra.mxu0 %v505
    %v507 = vpop.f32.mrf.mxu0
    %v508 = vadd.f32 %v417, %v507
    %v509 = vand.u32 %v192, 4294901760
    %v510 = vsub.f32 %v192, %v509
    %511 = vmatmul.f32.gmra.mxu0 %v510
    %v512 = vpop.f32.mrf.mxu0
    %v513 = vadd.f32 %v421, %v512
    %v514 = vand.u32 %v195, 4294901760
    %v515 = vsub.f32 %v195, %v514
    %516 = vmatmul.f32.gmra.mxu0 %v515
    %v517 = vpop.f32.mrf.mxu0
    %v518 = vadd.f32 %v425, %v517
    %v519 = vand.u32 %v198, 4294901760
    %v520 = vsub.f32 %v198, %v519
    %521 = vmatmul.f32.gmra.mxu0 %v520
    %v522 = vpop.f32.mrf.mxu0
    %v523 = vadd.f32 %v429, %v522
    %v524 = vand.u32 %v201, 4294901760
    %v525 = vsub.f32 %v201, %v524
    %526 = vmatmul.f32.gmra.mxu0 %v525
    %v527 = vpop.f32.mrf.mxu0
    %v528 = vadd.f32 %v433, %v527
    %v529 = vand.u32 %v204, 4294901760
    %v530 = vsub.f32 %v204, %v529
    %531 = vmatmul.f32.gmra.mxu0 %v530
    %v532 = vpop.f32.mrf.mxu0
    %v533 = vadd.f32 %v437, %v532
    %v534 = vand.u32 %v207, 4294901760
    %v535 = vsub.f32 %v207, %v534
    %536 = vmatmul.f32.gmra.mxu0 %v535
    %v537 = vpop.f32.mrf.mxu0
    %v538 = vadd.f32 %v441, %v537
    %v539 = vand.u32 %v210, 4294901760
    %v540 = vsub.f32 %v210, %v539
    %541 = vmatmul.f32.gmra.mxu0 %v540
    %v542 = vpop.f32.mrf.mxu0
    %v543 = vadd.f32 %v445, %v542
    %v544 = vand.u32 %v213, 4294901760
    %v545 = vsub.f32 %v213, %v544
    %546 = vmatmul.f32.gmra.mxu0 %v545
    %v547 = vpop.f32.mrf.mxu0
    %v548 = vadd.f32 %v449, %v547
    %v549 = vand.u32 %v216, 4294901760
    %v550 = vsub.f32 %v216, %v549
    %551 = vmatmul.f32.gmra.mxu0 %v550
    %v552 = vpop.f32.mrf.mxu0
    %v553 = vadd.f32 %v453, %v552
    %v554 = vand.u32 %v219, 4294901760
    %v555 = vsub.f32 %v219, %v554
    %556 = vmatmul.f32.gmra.mxu0 %v555
    %v557 = vpop.f32.mrf.mxu0
    %v558 = vadd.f32 %v457, %v557
    %559 = vdwg.mxu0
    %560 = vmatpush.msra.mxu0 0.0
    %561 = vmatpush.msra.mxu0 0.0
    %562 = vmatpush.msra.mxu0 0.0
    %563 = vmatpush.msra.mxu0 0.0
    %564 = vmatpush.msra.mxu0 0.0
    %565 = vmatpush.msra.mxu0 0.0
    %566 = vmatpush.msra.mxu0 0.0
    %567 = vmatpush.msra.mxu0 0.0
    %568 = vmatpush.msra.mxu0 0.0
    %569 = vmatpush.msra.mxu0 0.0
    %570 = vmatpush.msra.mxu0 0.0
    %571 = vmatpush.msra.mxu0 0.0
    %572 = vmatpush.msra.mxu0 0.0
    %573 = vmatpush.msra.mxu0 0.0
    %v574 = vand.u32 %v73, 4294901760
    %575 = vmatpush.msra.mxu0 %v574
    %v576 = vand.u32 %v72, 4294901760
    %577 = vmatpush.msra.mxu0 %v576
    %v578 = vand.u32 %v174, 4294901760
    %v579 = vsub.f32 %v174, %v578
    %v580 = vand.u32 %v579, 4294901760
    %581 = vmatmul.f32.gmra.mxu0 %v580
    %v582 = vpop.f32.mrf.mxu0
    %v583 = vadd.f32 %v483, %v582
    %v584 = vand.u32 %v177, 4294901760
    %v585 = vsub.f32 %v177, %v584
    %v586 = vand.u32 %v585, 4294901760
    %587 = vmatmul.f32.gmra.mxu0 %v586
    %v588 = vpop.f32.mrf.mxu0
    %v589 = vadd.f32 %v488, %v588
    %v590 = vand.u32 %v180, 4294901760
    %v591 = vsub.f32 %v180, %v590
    %v592 = vand.u32 %v591, 4294901760
    %593 = vmatmul.f32.gmra.mxu0 %v592
    %v594 = vpop.f32.mrf.mxu0
    %v595 = vadd.f32 %v493, %v594
    %v596 = vand.u32 %v183, 4294901760
    %v597 = vsub.f32 %v183, %v596
    %v598 = vand.u32 %v597, 4294901760
    %599 = vmatmul.f32.gmra.mxu0 %v598
    %v600 = vpop.f32.mrf.mxu0
    %v601 = vadd.f32 %v498, %v600
    %v602 = vand.u32 %v186, 4294901760
    %v603 = vsub.f32 %v186, %v602
    %v604 = vand.u32 %v603, 4294901760
    %605 = vmatmul.f32.gmra.mxu0 %v604
    %v606 = vpop.f32.mrf.mxu0
    %v607 = vadd.f32 %v503, %v606
    %v608 = vand.u32 %v189, 4294901760
    %v609 = vsub.f32 %v189, %v608
    %v610 = vand.u32 %v609, 4294901760
    %611 = vmatmul.f32.gmra.mxu0 %v610
    %v612 = vpop.f32.mrf.mxu0
    %v613 = vadd.f32 %v508, %v612
    %v614 = vand.u32 %v192, 4294901760
    %v615 = vsub.f32 %v192, %v614
    %v616 = vand.u32 %v615, 4294901760
    %617 = vmatmul.f32.gmra.mxu0 %v616
    %v618 = vpop.f32.mrf.mxu0
    %v619 = vadd.f32 %v513, %v618
    %v620 = vand.u32 %v195, 4294901760
    %v621 = vsub.f32 %v195, %v620
    %v622 = vand.u32 %v621, 4294901760
    %623 = vmatmul.f32.gmra.mxu0 %v622
    %v624 = vpop.f32.mrf.mxu0
    %v625 = vadd.f32 %v518, %v624
    %v626 = vand.u32 %v198, 4294901760
    %v627 = vsub.f32 %v198, %v626
    %v628 = vand.u32 %v627, 4294901760
    %629 = vmatmul.f32.gmra.mxu0 %v628
    %v630 = vpop.f32.mrf.mxu0
    %v631 = vadd.f32 %v523, %v630
    %v632 = vand.u32 %v201, 4294901760
    %v633 = vsub.f32 %v201, %v632
    %v634 = vand.u32 %v633, 4294901760
    %635 = vmatmul.f32.gmra.mxu0 %v634
    %v636 = vpop.f32.mrf.mxu0
    %v637 = vadd.f32 %v528, %v636
    %v638 = vand.u32 %v204, 4294901760
    %v639 = vsub.f32 %v204, %v638
    %v640 = vand.u32 %v639, 4294901760
    %641 = vmatmul.f32.gmra.mxu0 %v640
    %v642 = vpop.f32.mrf.mxu0
    %v643 = vadd.f32 %v533, %v642
    %v644 = vand.u32 %v207, 4294901760
    %v645 = vsub.f32 %v207, %v644
    %v646 = vand.u32 %v645, 4294901760
    %647 = vmatmul.f32.gmra.mxu0 %v646
    %v648 = vpop.f32.mrf.mxu0
    %v649 = vadd.f32 %v538, %v648
    %v650 = vand.u32 %v210, 4294901760
    %v651 = vsub.f32 %v210, %v650
    %v652 = vand.u32 %v651, 4294901760
    %653 = vmatmul.f32.gmra.mxu0 %v652
    %v654 = vpop.f32.mrf.mxu0
    %v655 = vadd.f32 %v543, %v654
    %v656 = vand.u32 %v213, 4294901760
    %v657 = vsub.f32 %v213, %v656
    %v658 = vand.u32 %v657, 4294901760
    %659 = vmatmul.f32.gmra.mxu0 %v658
    %v660 = vpop.f32.mrf.mxu0
    %v661 = vadd.f32 %v548, %v660
    %v662 = vand.u32 %v216, 4294901760
    %v663 = vsub.f32 %v216, %v662
    %v664 = vand.u32 %v663, 4294901760
    %665 = vmatmul.f32.gmra.mxu0 %v664
    %v666 = vpop.f32.mrf.mxu0
    %v667 = vadd.f32 %v553, %v666
    %v668 = vand.u32 %v219, 4294901760
    %v669 = vsub.f32 %v219, %v668
    %v670 = vand.u32 %v669, 4294901760
    %671 = vmatmul.f32.gmra.mxu0 %v670
    %v672 = vpop.f32.mrf.mxu0
    %v673 = vadd.f32 %v558, %v672
    %674 = vdwg.mxu0
    %675 = vmatpush.msra.mxu0 0.0
    %676 = vmatpush.msra.mxu0 0.0
    %677 = vmatpush.msra.mxu0 0.0
    %678 = vmatpush.msra.mxu0 0.0
    %679 = vmatpush.msra.mxu0 0.0
    %680 = vmatpush.msra.mxu0 0.0
    %681 = vmatpush.msra.mxu0 0.0
    %682 = vmatpush.msra.mxu0 0.0
    %683 = vmatpush.msra.mxu0 0.0
    %684 = vmatpush.msra.mxu0 0.0
    %685 = vmatpush.msra.mxu0 0.0
    %686 = vmatpush.msra.mxu0 0.0
    %687 = vmatpush.msra.mxu0 0.0
    %688 = vmatpush.msra.mxu0 0.0
    %v689 = vand.u32 %v73, 4294901760
    %v690 = vsub.f32 %v73, %v689
    %v691 = vand.u32 %v690, 4294901760
    %692 = vmatpush.msra.mxu0 %v691
    %v693 = vand.u32 %v72, 4294901760
    %v694 = vsub.f32 %v72, %v693
    %v695 = vand.u32 %v694, 4294901760
    %696 = vmatpush.msra.mxu0 %v695
    %v697 = vand.u32 %v174, 4294901760
    %698 = vmatmul.f32.gmra.mxu0 %v697
    %v699 = vpop.f32.mrf.mxu0
    %v700 = vadd.f32 %v583, %v699
    %v701 = vand.u32 %v177, 4294901760
    %702 = vmatmul.f32.gmra.mxu0 %v701
    %v703 = vpop.f32.mrf.mxu0
    %v704 = vadd.f32 %v589, %v703
    %v705 = vand.u32 %v180, 4294901760
    %706 = vmatmul.f32.gmra.mxu0 %v705
    %v707 = vpop.f32.mrf.mxu0
    %v708 = vadd.f32 %v595, %v707
    %v709 = vand.u32 %v183, 4294901760
    %710 = vmatmul.f32.gmra.mxu0 %v709
    %v711 = vpop.f32.mrf.mxu0
    %v712 = vadd.f32 %v601, %v711
    %v713 = vand.u32 %v186, 4294901760
    %714 = vmatmul.f32.gmra.mxu0 %v713
    %v715 = vpop.f32.mrf.mxu0
    %v716 = vadd.f32 %v607, %v715
    %v717 = vand.u32 %v189, 4294901760
    %718 = vmatmul.f32.gmra.mxu0 %v717
    %v719 = vpop.f32.mrf.mxu0
    %v720 = vadd.f32 %v613, %v719
    %v721 = vand.u32 %v192, 4294901760
    %722 = vmatmul.f32.gmra.mxu0 %v721
    %v723 = vpop.f32.mrf.mxu0
    %v724 = vadd.f32 %v619, %v723
    %v725 = vand.u32 %v195, 4294901760
    %726 = vmatmul.f32.gmra.mxu0 %v725
    %v727 = vpop.f32.mrf.mxu0
    %v728 = vadd.f32 %v625, %v727
    %v729 = vand.u32 %v198, 4294901760
    %730 = vmatmul.f32.gmra.mxu0 %v729
    %v731 = vpop.f32.mrf.mxu0
    %v732 = vadd.f32 %v631, %v731
    %v733 = vand.u32 %v201, 4294901760
    %734 = vmatmul.f32.gmra.mxu0 %v733
    %v735 = vpop.f32.mrf.mxu0
    %v736 = vadd.f32 %v637, %v735
    %v737 = vand.u32 %v204, 4294901760
    %738 = vmatmul.f32.gmra.mxu0 %v737
    %v739 = vpop.f32.mrf.mxu0
    %v740 = vadd.f32 %v643, %v739
    %v741 = vand.u32 %v207, 4294901760
    %742 = vmatmul.f32.gmra.mxu0 %v741
    %v743 = vpop.f32.mrf.mxu0
    %v744 = vadd.f32 %v649, %v743
    %v745 = vand.u32 %v210, 4294901760
    %746 = vmatmul.f32.gmra.mxu0 %v745
    %v747 = vpop.f32.mrf.mxu0
    %v748 = vadd.f32 %v655, %v747
    %v749 = vand.u32 %v213, 4294901760
    %750 = vmatmul.f32.gmra.mxu0 %v749
    %v751 = vpop.f32.mrf.mxu0
    %v752 = vadd.f32 %v661, %v751
    %v753 = vand.u32 %v216, 4294901760
    %754 = vmatmul.f32.gmra.mxu0 %v753
    %v755 = vpop.f32.mrf.mxu0
    %v756 = vadd.f32 %v667, %v755
    %v757 = vand.u32 %v219, 4294901760
    %758 = vmatmul.f32.gmra.mxu0 %v757
    %v759 = vpop.f32.mrf.mxu0
    %v760 = vadd.f32 %v673, %v759
    %761 = vdwg.mxu0
    %762 = vmatpush.msra.mxu0 0.0
    %763 = vmatpush.msra.mxu0 0.0
    %764 = vmatpush.msra.mxu0 0.0
    %765 = vmatpush.msra.mxu0 0.0
    %766 = vmatpush.msra.mxu0 0.0
    %767 = vmatpush.msra.mxu0 0.0
    %768 = vmatpush.msra.mxu0 0.0
    %769 = vmatpush.msra.mxu0 0.0
    %770 = vmatpush.msra.mxu0 0.0
    %771 = vmatpush.msra.mxu0 0.0
    %772 = vmatpush.msra.mxu0 0.0
    %773 = vmatpush.msra.mxu0 0.0
    %774 = vmatpush.msra.mxu0 0.0
    %775 = vmatpush.msra.mxu0 0.0
    %v776 = vand.u32 %v73, 4294901760
    %777 = vmatpush.msra.mxu0 %v776
    %v778 = vand.u32 %v72, 4294901760
    %779 = vmatpush.msra.mxu0 %v778
    %v780 = vand.u32 %v174, 4294901760
    %781 = vmatmul.f32.gmra.mxu0 %v780
    %v782 = vpop.f32.mrf.mxu0
    %v783 = vadd.f32 %v700, %v782
    %v784 = vand.u32 %v177, 4294901760
    %785 = vmatmul.f32.gmra.mxu0 %v784
    %v786 = vpop.f32.mrf.mxu0
    %v787 = vadd.f32 %v704, %v786
    %v788 = vand.u32 %v180, 4294901760
    %789 = vmatmul.f32.gmra.mxu0 %v788
    %v790 = vpop.f32.mrf.mxu0
    %v791 = vadd.f32 %v708, %v790
    %v792 = vand.u32 %v183, 4294901760
    %793 = vmatmul.f32.gmra.mxu0 %v792
    %v794 = vpop.f32.mrf.mxu0
    %v795 = vadd.f32 %v712, %v794
    %v796 = vand.u32 %v186, 4294901760
    %797 = vmatmul.f32.gmra.mxu0 %v796
    %v798 = vpop.f32.mrf.mxu0
    %v799 = vadd.f32 %v716, %v798
    %v800 = vand.u32 %v189, 4294901760
    %801 = vmatmul.f32.gmra.mxu0 %v800
    %v802 = vpop.f32.mrf.mxu0
    %v803 = vadd.f32 %v720, %v802
    %v804 = vand.u32 %v192, 4294901760
    %805 = vmatmul.f32.gmra.mxu0 %v804
    %v806 = vpop.f32.mrf.mxu0
    %v807 = vadd.f32 %v724, %v806
    %v808 = vand.u32 %v195, 4294901760
    %809 = vmatmul.f32.gmra.mxu0 %v808
    %v810 = vpop.f32.mrf.mxu0
    %v811 = vadd.f32 %v728, %v810
    %v812 = vand.u32 %v198, 4294901760
    %813 = vmatmul.f32.gmra.mxu0 %v812
    %v814 = vpop.f32.mrf.mxu0
    %v815 = vadd.f32 %v732, %v814
    %v816 = vand.u32 %v201, 4294901760
    %817 = vmatmul.f32.gmra.mxu0 %v816
    %v818 = vpop.f32.mrf.mxu0
    %v819 = vadd.f32 %v736, %v818
    %v820 = vand.u32 %v204, 4294901760
    %821 = vmatmul.f32.gmra.mxu0 %v820
    %v822 = vpop.f32.mrf.mxu0
    %v823 = vadd.f32 %v740, %v822
    %v824 = vand.u32 %v207, 4294901760
    %825 = vmatmul.f32.gmra.mxu0 %v824
    %v826 = vpop.f32.mrf.mxu0
    %v827 = vadd.f32 %v744, %v826
    %v828 = vand.u32 %v210, 4294901760
    %829 = vmatmul.f32.gmra.mxu0 %v828
    %v830 = vpop.f32.mrf.mxu0
    %v831 = vadd.f32 %v748, %v830
    %v832 = vand.u32 %v213, 4294901760
    %833 = vmatmul.f32.gmra.mxu0 %v832
    %v834 = vpop.f32.mrf.mxu0
    %v835 = vadd.f32 %v752, %v834
    %v836 = vand.u32 %v216, 4294901760
    %837 = vmatmul.f32.gmra.mxu0 %v836
    %v838 = vpop.f32.mrf.mxu0
    %v839 = vadd.f32 %v756, %v838
    %v840 = vand.u32 %v219, 4294901760
    %841 = vmatmul.f32.gmra.mxu0 %v840
    %v842 = vpop.f32.mrf.mxu0
    %v843 = vadd.f32 %v760, %v842
    %844 = vdwg.mxu0
    %846 = vset.pattern.permute.xlu0 0
    %847 = vperm.xlu0 %846, %v56
    %v848 = vpop.permute.xlu0 %847
    %851 = vset.pattern.permute.xlu0 0
    %852 = vperm.xlu0 %851, %v57
    %v853 = vpop.permute.xlu0 %852
    %856 = vset.pattern.permute.xlu0 0
    %857 = vperm.xlu0 %856, %v58
    %v858 = vpop.permute.xlu0 %857
    %861 = vset.pattern.permute.xlu0 0
    %862 = vperm.xlu0 %861, %v59
    %v863 = vpop.permute.xlu0 %862
    %866 = vset.pattern.permute.xlu0 0
    %867 = vperm.xlu0 %866, %v60
    %v868 = vpop.permute.xlu0 %867
    %871 = vset.pattern.permute.xlu0 0
    %872 = vperm.xlu0 %871, %v61
    %v873 = vpop.permute.xlu0 %872
    %876 = vset.pattern.permute.xlu0 0
    %877 = vperm.xlu0 %876, %v62
    %v878 = vpop.permute.xlu0 %877
    %881 = vset.pattern.permute.xlu0 0
    %882 = vperm.xlu0 %881, %v63
    %v883 = vpop.permute.xlu0 %882
    %886 = vset.pattern.permute.xlu0 0
    %887 = vperm.xlu0 %886, %v64
    %v888 = vpop.permute.xlu0 %887
    %891 = vset.pattern.permute.xlu0 0
    %892 = vperm.xlu0 %891, %v65
    %v893 = vpop.permute.xlu0 %892
    %896 = vset.pattern.permute.xlu0 0
    %897 = vperm.xlu0 %896, %v66
    %v898 = vpop.permute.xlu0 %897
    %901 = vset.pattern.permute.xlu0 0
    %902 = vperm.xlu0 %901, %v67
    %v903 = vpop.permute.xlu0 %902
    %906 = vset.pattern.permute.xlu0 0
    %907 = vperm.xlu0 %906, %v68
    %v908 = vpop.permute.xlu0 %907
    %911 = vset.pattern.permute.xlu0 0
    %912 = vperm.xlu0 %911, %v69
    %v913 = vpop.permute.xlu0 %912
    %916 = vset.pattern.permute.xlu0 0
    %917 = vperm.xlu0 %916, %v70
    %v918 = vpop.permute.xlu0 %917
    %921 = vset.pattern.permute.xlu0 0
    %922 = vperm.xlu0 %921, %v71
    %v923 = vpop.permute.xlu0 %922
    %v925 = vmul.f32 %v783, %v848
    %v926 = vmul.f32 %v787, %v853
    %v927 = vmul.f32 %v791, %v858
    %v928 = vmul.f32 %v795, %v863
    %v929 = vmul.f32 %v799, %v868
    %v930 = vmul.f32 %v803, %v873
    %v931 = vmul.f32 %v807, %v878
    %v932 = vmul.f32 %v811, %v883
    %v933 = vmul.f32 %v815, %v888
    %v934 = vmul.f32 %v819, %v893
    %v935 = vmul.f32 %v823, %v898
    %v936 = vmul.f32 %v827, %v903
    %v937 = vmul.f32 %v831, %v908
    %v938 = vmul.f32 %v835, %v913
    %v939 = vmul.f32 %v839, %v918
    %v940 = vmul.f32 %v843, %v923
    %941 = vset.pattern.permute.xlu0 0
    %942 = vperm.xlu0 %941, %v40
    %v943 = vpop.permute.xlu0 %942
    %944 = vset.pattern.permute.xlu0 0
    %945 = vperm.xlu0 %944, %v41
    %v946 = vpop.permute.xlu0 %945
    %947 = vset.pattern.permute.xlu0 0
    %948 = vperm.xlu0 %947, %v42
    %v949 = vpop.permute.xlu0 %948
    %950 = vset.pattern.permute.xlu0 0
    %951 = vperm.xlu0 %950, %v43
    %v952 = vpop.permute.xlu0 %951
    %953 = vset.pattern.permute.xlu0 0
    %954 = vperm.xlu0 %953, %v44
    %v955 = vpop.permute.xlu0 %954
    %956 = vset.pattern.permute.xlu0 0
    %957 = vperm.xlu0 %956, %v45
    %v958 = vpop.permute.xlu0 %957
    %959 = vset.pattern.permute.xlu0 0
    %960 = vperm.xlu0 %959, %v46
    %v961 = vpop.permute.xlu0 %960
    %962 = vset.pattern.permute.xlu0 0
    %963 = vperm.xlu0 %962, %v47
    %v964 = vpop.permute.xlu0 %963
    %965 = vset.pattern.permute.xlu0 0
    %966 = vperm.xlu0 %965, %v48
    %v967 = vpop.permute.xlu0 %966
    %968 = vset.pattern.permute.xlu0 0
    %969 = vperm.xlu0 %968, %v49
    %v970 = vpop.permute.xlu0 %969
    %971 = vset.pattern.permute.xlu0 0
    %972 = vperm.xlu0 %971, %v50
    %v973 = vpop.permute.xlu0 %972
    %974 = vset.pattern.permute.xlu0 0
    %975 = vperm.xlu0 %974, %v51
    %v976 = vpop.permute.xlu0 %975
    %977 = vset.pattern.permute.xlu0 0
    %978 = vperm.xlu0 %977, %v52
    %v979 = vpop.permute.xlu0 %978
    %980 = vset.pattern.permute.xlu0 0
    %981 = vperm.xlu0 %980, %v53
    %v982 = vpop.permute.xlu0 %981
    %983 = vset.pattern.permute.xlu0 0
    %984 = vperm.xlu0 %983, %v54
    %v985 = vpop.permute.xlu0 %984
    %986 = vset.pattern.permute.xlu0 0
    %987 = vperm.xlu0 %986, %v55
    %v988 = vpop.permute.xlu0 %987
    %vm989 = vcmp.eq.s32.totalorder %v75, %v943
    %vm990 = vcmp.eq.s32.totalorder %v75, %v946
    %vm991 = vcmp.eq.s32.totalorder %v75, %v949
    %vm992 = vcmp.eq.s32.totalorder %v75, %v952
    %vm993 = vcmp.eq.s32.totalorder %v75, %v955
    %vm994 = vcmp.eq.s32.totalorder %v75, %v958
    %vm995 = vcmp.eq.s32.totalorder %v75, %v961
    %vm996 = vcmp.eq.s32.totalorder %v75, %v964
    %vm997 = vcmp.eq.s32.totalorder %v75, %v967
    %vm998 = vcmp.eq.s32.totalorder %v75, %v970
    %vm999 = vcmp.eq.s32.totalorder %v75, %v973
    %vm1000 = vcmp.eq.s32.totalorder %v75, %v976
    %vm1001 = vcmp.eq.s32.totalorder %v75, %v979
    %vm1002 = vcmp.eq.s32.totalorder %v75, %v982
    %vm1003 = vcmp.eq.s32.totalorder %v75, %v985
    %vm1004 = vcmp.eq.s32.totalorder %v75, %v988
    %v1005 = vsel %vm989, 1, 0
    %v1006 = vsel %vm990, 1, 0
    %v1007 = vsel %vm991, 1, 0
    %v1008 = vsel %vm992, 1, 0
    %v1009 = vsel %vm993, 1, 0
    %v1010 = vsel %vm994, 1, 0
    %v1011 = vsel %vm995, 1, 0
    %v1012 = vsel %vm996, 1, 0
    %v1013 = vsel %vm997, 1, 0
    %v1014 = vsel %vm998, 1, 0
    %v1015 = vsel %vm999, 1, 0
    %v1016 = vsel %vm1000, 1, 0
    %v1017 = vsel %vm1001, 1, 0
    %v1018 = vsel %vm1002, 1, 0
    %v1019 = vsel %vm1003, 1, 0
    %v1020 = vsel %vm1004, 1, 0
    %v1021 = vcvt.s32.f32 %v1005
    %v1022 = vcvt.s32.f32 %v1006
    %v1023 = vcvt.s32.f32 %v1007
    %v1024 = vcvt.s32.f32 %v1008
    %v1025 = vcvt.s32.f32 %v1009
    %v1026 = vcvt.s32.f32 %v1010
    %v1027 = vcvt.s32.f32 %v1011
    %v1028 = vcvt.s32.f32 %v1012
    %v1029 = vcvt.s32.f32 %v1013
    %v1030 = vcvt.s32.f32 %v1014
    %v1031 = vcvt.s32.f32 %v1015
    %v1032 = vcvt.s32.f32 %v1016
    %v1033 = vcvt.s32.f32 %v1017
    %v1034 = vcvt.s32.f32 %v1018
    %v1035 = vcvt.s32.f32 %v1019
    %v1036 = vcvt.s32.f32 %v1020
    %v1037 = vld [vmem:[#allocation2] sm:$0xff]
    %v1038 = vld [vmem:[#allocation2 + $0x8] sm:$0xff]
    %1039 = vxpose.xlu0.b32.start [1/16] %v1021, 128
    %1040 = vxpose.xlu0.b32.cont [2/16] %v1022, 128
    %1041 = vxpose.xlu0.b32.cont [3/16] %v1023, 128
    %1042 = vxpose.xlu0.b32.cont [4/16] %v1024, 128
    %1043 = vxpose.xlu0.b32.cont [5/16] %v1025, 128
    %1044 = vxpose.xlu0.b32.cont [6/16] %v1026, 128
    %1045 = vxpose.xlu0.b32.cont [7/16] %v1027, 128
    %1046 = vxpose.xlu0.b32.cont [8/16] %v1028, 128
    %1047 = vxpose.xlu0.b32.cont [9/16] %v1029, 128
    %1048 = vxpose.xlu0.b32.cont [10/16] %v1030, 128
    %1049 = vxpose.xlu0.b32.cont [11/16] %v1031, 128
    %1050 = vxpose.xlu0.b32.cont [12/16] %v1032, 128
    %1051 = vxpose.xlu0.b32.cont [13/16] %v1033, 128
    %1052 = vxpose.xlu0.b32.cont [14/16] %v1034, 128
    %1053 = vxpose.xlu0.b32.cont [15/16] %v1035, 128
    %1054 = vxpose.xlu0.b32.end [16/16] %v1036, 128
    %v1055 = vpop.trf.xlu0
    %v1056 = vpop.trf.xlu0
    %v1057 = vpop.trf.xlu0
    %v1058 = vpop.trf.xlu0
    %v1059 = vpop.trf.xlu0
    %v1060 = vpop.trf.xlu0
    %v1061 = vpop.trf.xlu0
    %v1062 = vpop.trf.xlu0
    %v1063 = vpop.trf.xlu0
    %v1064 = vpop.trf.xlu0
    %v1065 = vpop.trf.xlu0
    %v1066 = vpop.trf.xlu0
    %v1067 = vpop.trf.xlu0
    %v1068 = vpop.trf.xlu0
    %v1069 = vpop.trf.xlu0
    %v1070 = vpop.trf.xlu0
    %v1071 = vand.u32 %v940, 4294901760
    %1072 = vmatpush.msra.mxu0 %v1071
    %v1073 = vand.u32 %v939, 4294901760
    %1074 = vmatpush.msra.mxu0 %v1073
    %v1075 = vand.u32 %v938, 4294901760
    %1076 = vmatpush.msra.mxu0 %v1075
    %v1077 = vand.u32 %v937, 4294901760
    %1078 = vmatpush.msra.mxu0 %v1077
    %v1079 = vand.u32 %v936, 4294901760
    %1080 = vmatpush.msra.mxu0 %v1079
    %v1081 = vand.u32 %v935, 4294901760
    %1082 = vmatpush.msra.mxu0 %v1081
    %v1083 = vand.u32 %v934, 4294901760
    %1084 = vmatpush.msra.mxu0 %v1083
    %v1085 = vand.u32 %v933, 4294901760
    %1086 = vmatpush.msra.mxu0 %v1085
    %v1087 = vand.u32 %v932, 4294901760
    %1088 = vmatpush.msra.mxu0 %v1087
    %v1089 = vand.u32 %v931, 4294901760
    %1090 = vmatpush.msra.mxu0 %v1089
    %v1091 = vand.u32 %v930, 4294901760
    %1092 = vmatpush.msra.mxu0 %v1091
    %v1093 = vand.u32 %v929, 4294901760
    %1094 = vmatpush.msra.mxu0 %v1093
    %v1095 = vand.u32 %v928, 4294901760
    %1096 = vmatpush.msra.mxu0 %v1095
    %v1097 = vand.u32 %v927, 4294901760
    %1098 = vmatpush.msra.mxu0 %v1097
    %v1099 = vand.u32 %v926, 4294901760
    %1100 = vmatpush.msra.mxu0 %v1099
    %v1101 = vand.u32 %v925, 4294901760
    %1102 = vmatpush.msra.mxu0 %v1101
    %v1103 = vand.u32 %v1055, 4294901760
    %v1104 = vsub.f32 %v1055, %v1103
    %v1105 = vand.u32 %v1104, 4294901760
    %v1106 = vsub.f32 %v1104, %v1105
    %v1107 = vand.u32 %v1106, 4294901760
    %1108 = vmatmul.f32.gmra.mxu0 %v1107
    %v1109 = vpop.f32.mrf.mxu0
    %v1110 = vadd.f32 0.0, %v1109
    %v1111 = vand.u32 %v1056, 4294901760
    %v1112 = vsub.f32 %v1056, %v1111
    %v1113 = vand.u32 %v1112, 4294901760
    %v1114 = vsub.f32 %v1112, %v1113
    %v1115 = vand.u32 %v1114, 4294901760
    %1116 = vmatmul.f32.gmra.mxu0 %v1115
    %v1117 = vpop.f32.mrf.mxu0
    %v1118 = vadd.f32 0.0, %v1117
    %1119 = vdwg.mxu0
    %v1120 = vand.u32 %v940, 4294901760
    %v1121 = vsub.f32 %v940, %v1120
    %v1122 = vand.u32 %v1121, 4294901760
    %v1123 = vsub.f32 %v1121, %v1122
    %v1124 = vand.u32 %v1123, 4294901760
    %1125 = vmatpush.msra.mxu0 %v1124
    %v1126 = vand.u32 %v939, 4294901760
    %v1127 = vsub.f32 %v939, %v1126
    %v1128 = vand.u32 %v1127, 4294901760
    %v1129 = vsub.f32 %v1127, %v1128
    %v1130 = vand.u32 %v1129, 4294901760
    %1131 = vmatpush.msra.mxu0 %v1130
    %v1132 = vand.u32 %v938, 4294901760
    %v1133 = vsub.f32 %v938, %v1132
    %v1134 = vand.u32 %v1133, 4294901760
    %v1135 = vsub.f32 %v1133, %v1134
    %v1136 = vand.u32 %v1135, 4294901760
    %1137 = vmatpush.msra.mxu0 %v1136
    %v1138 = vand.u32 %v937, 4294901760
    %v1139 = vsub.f32 %v937, %v1138
    %v1140 = vand.u32 %v1139, 4294901760
    %v1141 = vsub.f32 %v1139, %v1140
    %v1142 = vand.u32 %v1141, 4294901760
    %1143 = vmatpush.msra.mxu0 %v1142
    %v1144 = vand.u32 %v936, 4294901760
    %v1145 = vsub.f32 %v936, %v1144
    %v1146 = vand.u32 %v1145, 4294901760
    %v1147 = vsub.f32 %v1145, %v1146
    %v1148 = vand.u32 %v1147, 4294901760
    %1149 = vmatpush.msra.mxu0 %v1148
    %v1150 = vand.u32 %v935, 4294901760
    %v1151 = vsub.f32 %v935, %v1150
    %v1152 = vand.u32 %v1151, 4294901760
    %v1153 = vsub.f32 %v1151, %v1152
    %v1154 = vand.u32 %v1153, 4294901760
    %1155 = vmatpush.msra.mxu0 %v1154
    %v1156 = vand.u32 %v934, 4294901760
    %v1157 = vsub.f32 %v934, %v1156
    %v1158 = vand.u32 %v1157, 4294901760
    %v1159 = vsub.f32 %v1157, %v1158
    %v1160 = vand.u32 %v1159, 4294901760
    %1161 = vmatpush.msra.mxu0 %v1160
    %v1162 = vand.u32 %v933, 4294901760
    %v1163 = vsub.f32 %v933, %v1162
    %v1164 = vand.u32 %v1163, 4294901760
    %v1165 = vsub.f32 %v1163, %v1164
    %v1166 = vand.u32 %v1165, 4294901760
    %1167 = vmatpush.msra.mxu0 %v1166
    %v1168 = vand.u32 %v932, 4294901760
    %v1169 = vsub.f32 %v932, %v1168
    %v1170 = vand.u32 %v1169, 4294901760
    %v1171 = vsub.f32 %v1169, %v1170
    %v1172 = vand.u32 %v1171, 4294901760
    %1173 = vmatpush.msra.mxu0 %v1172
    %v1174 = vand.u32 %v931, 4294901760
    %v1175 = vsub.f32 %v931, %v1174
    %v1176 = vand.u32 %v1175, 4294901760
    %v1177 = vsub.f32 %v1175, %v1176
    %v1178 = vand.u32 %v1177, 4294901760
    %1179 = vmatpush.msra.mxu0 %v1178
    %v1180 = vand.u32 %v930, 4294901760
    %v1181 = vsub.f32 %v930, %v1180
    %v1182 = vand.u32 %v1181, 4294901760
    %v1183 = vsub.f32 %v1181, %v1182
    %v1184 = vand.u32 %v1183, 4294901760
    %1185 = vmatpush.msra.mxu0 %v1184
    %v1186 = vand.u32 %v929, 4294901760
    %v1187 = vsub.f32 %v929, %v1186
    %v1188 = vand.u32 %v1187, 4294901760
    %v1189 = vsub.f32 %v1187, %v1188
    %v1190 = vand.u32 %v1189, 4294901760
    %1191 = vmatpush.msra.mxu0 %v1190
    %v1192 = vand.u32 %v928, 4294901760
    %v1193 = vsub.f32 %v928, %v1192
    %v1194 = vand.u32 %v1193, 4294901760
    %v1195 = vsub.f32 %v1193, %v1194
    %v1196 = vand.u32 %v1195, 4294901760
    %1197 = vmatpush.msra.mxu0 %v1196
    %v1198 = vand.u32 %v927, 4294901760
    %v1199 = vsub.f32 %v927, %v1198
    %v1200 = vand.u32 %v1199, 4294901760
    %v1201 = vsub.f32 %v1199, %v1200
    %v1202 = vand.u32 %v1201, 4294901760
    %1203 = vmatpush.msra.mxu0 %v1202
    %v1204 = vand.u32 %v926, 4294901760
    %v1205 = vsub.f32 %v926, %v1204
    %v1206 = vand.u32 %v1205, 4294901760
    %v1207 = vsub.f32 %v1205, %v1206
    %v1208 = vand.u32 %v1207, 4294901760
    %1209 = vmatpush.msra.mxu0 %v1208
    %v1210 = vand.u32 %v925, 4294901760
    %v1211 = vsub.f32 %v925, %v1210
    %v1212 = vand.u32 %v1211, 4294901760
    %v1213 = vsub.f32 %v1211, %v1212
    %v1214 = vand.u32 %v1213, 4294901760
    %1215 = vmatpush.msra.mxu0 %v1214
    %v1216 = vand.u32 %v1055, 4294901760
    %1217 = vmatmul.f32.gmra.mxu0 %v1216
    %v1218 = vpop.f32.mrf.mxu0
    %v1219 = vadd.f32 %v1110, %v1218
    %v1220 = vand.u32 %v1056, 4294901760
    %1221 = vmatmul.f32.gmra.mxu0 %v1220
    %v1222 = vpop.f32.mrf.mxu0
    %v1223 = vadd.f32 %v1118, %v1222
    %1224 = vdwg.mxu0
    %v1225 = vand.u32 %v940, 4294901760
    %v1226 = vsub.f32 %v940, %v1225
    %1227 = vmatpush.msra.mxu0 %v1226
    %v1228 = vand.u32 %v939, 4294901760
    %v1229 = vsub.f32 %v939, %v1228
    %1230 = vmatpush.msra.mxu0 %v1229
    %v1231 = vand.u32 %v938, 4294901760
    %v1232 = vsub.f32 %v938, %v1231
    %1233 = vmatpush.msra.mxu0 %v1232
    %v1234 = vand.u32 %v937, 4294901760
    %v1235 = vsub.f32 %v937, %v1234
    %1236 = vmatpush.msra.mxu0 %v1235
    %v1237 = vand.u32 %v936, 4294901760
    %v1238 = vsub.f32 %v936, %v1237
    %1239 = vmatpush.msra.mxu0 %v1238
    %v1240 = vand.u32 %v935, 4294901760
    %v1241 = vsub.f32 %v935, %v1240
    %1242 = vmatpush.msra.mxu0 %v1241
    %v1243 = vand.u32 %v934, 4294901760
    %v1244 = vsub.f32 %v934, %v1243
    %1245 = vmatpush.msra.mxu0 %v1244
    %v1246 = vand.u32 %v933, 4294901760
    %v1247 = vsub.f32 %v933, %v1246
    %1248 = vmatpush.msra.mxu0 %v1247
    %v1249 = vand.u32 %v932, 4294901760
    %v1250 = vsub.f32 %v932, %v1249
    %1251 = vmatpush.msra.mxu0 %v1250
    %v1252 = vand.u32 %v931, 4294901760
    %v1253 = vsub.f32 %v931, %v1252
    %1254 = vmatpush.msra.mxu0 %v1253
    %v1255 = vand.u32 %v930, 4294901760
    %v1256 = vsub.f32 %v930, %v1255
    %1257 = vmatpush.msra.mxu0 %v1256
    %v1258 = vand.u32 %v929, 4294901760
    %v1259 = vsub.f32 %v929, %v1258
    %1260 = vmatpush.msra.mxu0 %v1259
    %v1261 = vand.u32 %v928, 4294901760
    %v1262 = vsub.f32 %v928, %v1261
    %1263 = vmatpush.msra.mxu0 %v1262
    %v1264 = vand.u32 %v927, 4294901760
    %v1265 = vsub.f32 %v927, %v1264
    %1266 = vmatpush.msra.mxu0 %v1265
    %v1267 = vand.u32 %v926, 4294901760
    %v1268 = vsub.f32 %v926, %v1267
    %1269 = vmatpush.msra.mxu0 %v1268
    %v1270 = vand.u32 %v925, 4294901760
    %v1271 = vsub.f32 %v925, %v1270
    %1272 = vmatpush.msra.mxu0 %v1271
    %v1273 = vand.u32 %v1055, 4294901760
    %v1274 = vsub.f32 %v1055, %v1273
    %1275 = vmatmul.f32.gmra.mxu0 %v1274
    %v1276 = vpop.f32.mrf.mxu0
    %v1277 = vadd.f32 %v1219, %v1276
    %v1278 = vand.u32 %v1056, 4294901760
    %v1279 = vsub.f32 %v1056, %v1278
    %1280 = vmatmul.f32.gmra.mxu0 %v1279
    %v1281 = vpop.f32.mrf.mxu0
    %v1282 = vadd.f32 %v1223, %v1281
    %1283 = vdwg.mxu0
    %v1284 = vand.u32 %v940, 4294901760
    %1285 = vmatpush.msra.mxu0 %v1284
    %v1286 = vand.u32 %v939, 4294901760
    %1287 = vmatpush.msra.mxu0 %v1286
    %v1288 = vand.u32 %v938, 4294901760
    %1289 = vmatpush.msra.mxu0 %v1288
    %v1290 = vand.u32 %v937, 4294901760
    %1291 = vmatpush.msra.mxu0 %v1290
    %v1292 = vand.u32 %v936, 4294901760
    %1293 = vmatpush.msra.mxu0 %v1292
    %v1294 = vand.u32 %v935, 4294901760
    %1295 = vmatpush.msra.mxu0 %v1294
    %v1296 = vand.u32 %v934, 4294901760
    %1297 = vmatpush.msra.mxu0 %v1296
    %v1298 = vand.u32 %v933, 4294901760
    %1299 = vmatpush.msra.mxu0 %v1298
    %v1300 = vand.u32 %v932, 4294901760
    %1301 = vmatpush.msra.mxu0 %v1300
    %v1302 = vand.u32 %v931, 4294901760
    %1303 = vmatpush.msra.mxu0 %v1302
    %v1304 = vand.u32 %v930, 4294901760
    %1305 = vmatpush.msra.mxu0 %v1304
    %v1306 = vand.u32 %v929, 4294901760
    %1307 = vmatpush.msra.mxu0 %v1306
    %v1308 = vand.u32 %v928, 4294901760
    %1309 = vmatpush.msra.mxu0 %v1308
    %v1310 = vand.u32 %v927, 4294901760
    %1311 = vmatpush.msra.mxu0 %v1310
    %v1312 = vand.u32 %v926, 4294901760
    %1313 = vmatpush.msra.mxu0 %v1312
    %v1314 = vand.u32 %v925, 4294901760
    %1315 = vmatpush.msra.mxu0 %v1314
    %v1316 = vand.u32 %v1055, 4294901760
    %v1317 = vsub.f32 %v1055, %v1316
    %v1318 = vand.u32 %v1317, 4294901760
    %1319 = vmatmul.f32.gmra.mxu0 %v1318
    %v1320 = vpop.f32.mrf.mxu0
    %v1321 = vadd.f32 %v1277, %v1320
    %v1322 = vand.u32 %v1056, 4294901760
    %v1323 = vsub.f32 %v1056, %v1322
    %v1324 = vand.u32 %v1323, 4294901760
    %1325 = vmatmul.f32.gmra.mxu0 %v1324
    %v1326 = vpop.f32.mrf.mxu0
    %v1327 = vadd.f32 %v1282, %v1326
    %1328 = vdwg.mxu0
    %v1329 = vand.u32 %v940, 4294901760
    %v1330 = vsub.f32 %v940, %v1329
    %v1331 = vand.u32 %v1330, 4294901760
    %1332 = vmatpush.msra.mxu0 %v1331
    %v1333 = vand.u32 %v939, 4294901760
    %v1334 = vsub.f32 %v939, %v1333
    %v1335 = vand.u32 %v1334, 4294901760
    %1336 = vmatpush.msra.mxu0 %v1335
    %v1337 = vand.u32 %v938, 4294901760
    %v1338 = vsub.f32 %v938, %v1337
    %v1339 = vand.u32 %v1338, 4294901760
    %1340 = vmatpush.msra.mxu0 %v1339
    %v1341 = vand.u32 %v937, 4294901760
    %v1342 = vsub.f32 %v937, %v1341
    %v1343 = vand.u32 %v1342, 4294901760
    %1344 = vmatpush.msra.mxu0 %v1343
    %v1345 = vand.u32 %v936, 4294901760
    %v1346 = vsub.f32 %v936, %v1345
    %v1347 = vand.u32 %v1346, 4294901760
    %1348 = vmatpush.msra.mxu0 %v1347
    %v1349 = vand.u32 %v935, 4294901760
    %v1350 = vsub.f32 %v935, %v1349
    %v1351 = vand.u32 %v1350, 4294901760
    %1352 = vmatpush.msra.mxu0 %v1351
    %v1353 = vand.u32 %v934, 4294901760
    %v1354 = vsub.f32 %v934, %v1353
    %v1355 = vand.u32 %v1354, 4294901760
    %1356 = vmatpush.msra.mxu0 %v1355
    %v1357 = vand.u32 %v933, 4294901760
    %v1358 = vsub.f32 %v933, %v1357
    %v1359 = vand.u32 %v1358, 4294901760
    %1360 = vmatpush.msra.mxu0 %v1359
    %v1361 = vand.u32 %v932, 4294901760
    %v1362 = vsub.f32 %v932, %v1361
    %v1363 = vand.u32 %v1362, 4294901760
    %1364 = vmatpush.msra.mxu0 %v1363
    %v1365 = vand.u32 %v931, 4294901760
    %v1366 = vsub.f32 %v931, %v1365
    %v1367 = vand.u32 %v1366, 4294901760
    %1368 = vmatpush.msra.mxu0 %v1367
    %v1369 = vand.u32 %v930, 4294901760
    %v1370 = vsub.f32 %v930, %v1369
    %v1371 = vand.u32 %v1370, 4294901760
    %1372 = vmatpush.msra.mxu0 %v1371
    %v1373 = vand.u32 %v929, 4294901760
    %v1374 = vsub.f32 %v929, %v1373
    %v1375 = vand.u32 %v1374, 4294901760
    %1376 = vmatpush.msra.mxu0 %v1375
    %v1377 = vand.u32 %v928, 4294901760
    %v1378 = vsub.f32 %v928, %v1377
    %v1379 = vand.u32 %v1378, 4294901760
    %1380 = vmatpush.msra.mxu0 %v1379
    %v1381 = vand.u32 %v927, 4294901760
    %v1382 = vsub.f32 %v927, %v1381
    %v1383 = vand.u32 %v1382, 4294901760
    %1384 = vmatpush.msra.mxu0 %v1383
    %v1385 = vand.u32 %v926, 4294901760
    %v1386 = vsub.f32 %v926, %v1385
    %v1387 = vand.u32 %v1386, 4294901760
    %1388 = vmatpush.msra.mxu0 %v1387
    %v1389 = vand.u32 %v925, 4294901760
    %v1390 = vsub.f32 %v925, %v1389
    %v1391 = vand.u32 %v1390, 4294901760
    %1392 = vmatpush.msra.mxu0 %v1391
    %v1393 = vand.u32 %v1055, 4294901760
    %1394 = vmatmul.f32.gmra.mxu0 %v1393
    %v1395 = vpop.f32.mrf.mxu0
    %v1396 = vadd.f32 %v1321, %v1395
    %v1397 = vand.u32 %v1056, 4294901760
    %1398 = vmatmul.f32.gmra.mxu0 %v1397
    %v1399 = vpop.f32.mrf.mxu0
    %v1400 = vadd.f32 %v1327, %v1399
    %1401 = vdwg.mxu0
    %v1402 = vand.u32 %v940, 4294901760
    %1403 = vmatpush.msra.mxu0 %v1402
    %v1404 = vand.u32 %v939, 4294901760
    %1405 = vmatpush.msra.mxu0 %v1404
    %v1406 = vand.u32 %v938, 4294901760
    %1407 = vmatpush.msra.mxu0 %v1406
    %v1408 = vand.u32 %v937, 4294901760
    %1409 = vmatpush.msra.mxu0 %v1408
    %v1410 = vand.u32 %v936, 4294901760
    %1411 = vmatpush.msra.mxu0 %v1410
    %v1412 = vand.u32 %v935, 4294901760
    %1413 = vmatpush.msra.mxu0 %v1412
    %v1414 = vand.u32 %v934, 4294901760
    %1415 = vmatpush.msra.mxu0 %v1414
    %v1416 = vand.u32 %v933, 4294901760
    %1417 = vmatpush.msra.mxu0 %v1416
    %v1418 = vand.u32 %v932, 4294901760
    %1419 = vmatpush.msra.mxu0 %v1418
    %v1420 = vand.u32 %v931, 4294901760
    %1421 = vmatpush.msra.mxu0 %v1420
    %v1422 = vand.u32 %v930, 4294901760
    %1423 = vmatpush.msra.mxu0 %v1422
    %v1424 = vand.u32 %v929, 4294901760
    %1425 = vmatpush.msra.mxu0 %v1424
    %v1426 = vand.u32 %v928, 4294901760
    %1427 = vmatpush.msra.mxu0 %v1426
    %v1428 = vand.u32 %v927, 4294901760
    %1429 = vmatpush.msra.mxu0 %v1428
    %v1430 = vand.u32 %v926, 4294901760
    %1431 = vmatpush.msra.mxu0 %v1430
    %v1432 = vand.u32 %v925, 4294901760
    %1433 = vmatpush.msra.mxu0 %v1432
    %v1434 = vand.u32 %v1055, 4294901760
    %1435 = vmatmul.f32.gmra.mxu0 %v1434
    %v1436 = vpop.f32.mrf.mxu0
    %v1437 = vadd.f32 %v1396, %v1436
    %v1438 = vand.u32 %v1056, 4294901760
    %1439 = vmatmul.f32.gmra.mxu0 %v1438
    %v1440 = vpop.f32.mrf.mxu0
    %v1441 = vadd.f32 %v1400, %v1440
    %1442 = vdwg.mxu0
    %v1443 = vadd.f32 %v1037, %v1437
    %v1444 = vadd.f32 %v1038, %v1441
    %1445 = vst [vmem:[#allocation2] sm:$0xff] %v1443
    %1446 = vst [vmem:[#allocation2 + $0x8] sm:$0xff] %v1444
    // Predicated region
    $region22: #{tpu_custom_call.1} parent=1 // pred_check
      _
    $region23: #{tpu_custom_call.1} parent=1 // pred_check_branch
      %1448 = sbr.rel (0) target = $region25
    $region24: #{tpu_custom_call.1} parent=1 // pred_region
      %1450 = vsyncadd [#allocation3], 0
      %s1451 = sshll.u32 [#allocation2], 4
      %s1452 = int_to_ptr.vmem [resolvable:$true] %s1451
      %s1453 = sshll.u32 %s4, 4
      %s1454 = int_to_ptr.hbm [resolvable:$true] %s1453
      %1459 = dma.vmem_to_hbm [thread:$0]  %s1452, 256, %s1454, [#allocation3], 128, 128, 8
    $region25: #{tpu_custom_call.1} parent=1 // pred_fallthru
      _
    // Predicated region
    $region26: #{tpu_custom_call.1} parent=1 // pred_check
      _
    $region27: #{tpu_custom_call.1} parent=1 // pred_check_branch
      %1461 = sbr.rel (0) target = $region29
    $region28: #{tpu_custom_call.1} parent=1 // pred_region
      %1463 = dma.done [#allocation3], 256
    $region29: #{tpu_custom_call.1} parent=1 // pred_fallthru
      _
    %1464 = vsyncpa [#allocation3], 1

</llo_original>
